<compile_context>
chip_gen: v7x
topology: tpu7x:2x2x1
jax: 0.10.0
libtpu: 0.0.40
codegen_flags: <defaults>
</compile_context>

<pallas_src>
import functools

import numpy as np
import jax
import jax.numpy as jnp
from jax import lax
from jax.experimental import pallas as pl
from jax.experimental.pallas import tpu as pltpu


def _tcn_bn_kernel(x_ref, w_ref, shift_ref, o_ref, stacked_ref, *,
                   K, V, pad, T, T_out, C_in, compute_dtype):
    # x_ref:       (1, C_in, T*V)       un-padded input slab (original dtype)
    # w_ref:       (Ct, K*C_in)         conv taps (tap-major rows), BN scale folded
    # shift_ref:   (Ct, 1)              BN shift + conv bias (f32)
    # o_ref:       (1, Ct, T_out*V)     lane-dense output tile
    # stacked_ref: (K*C_in, T_out*V)    VMEM scratch: stacked shifted taps

    # Assemble the stacked RHS once per batch element: the C_out grid axis is
    # the innermost, "arbitrary" axis, so pid(1)==0 marks a fresh batch index
    # and the scratch is reused across all C_out tiles of that element.
    @pl.when(pl.program_id(1) == 0)
    def _build_stacked():
        for k in range(K):                      # K small & static: unrolled
            t_lo = max(0, pad - k)              # valid output-row range of tap k
            t_hi = min(T_out, T + pad - k)
            rows = slice(k * C_in, (k + 1) * C_in)
            if t_lo > 0:                        # zero-pad (left T boundary)
                stacked_ref[rows, : t_lo * V] = jnp.zeros(
                    (C_in, t_lo * V), compute_dtype)
            if t_hi < T_out:                    # zero-pad (right T boundary)
                stacked_ref[rows, t_hi * V:] = jnp.zeros(
                    (C_in, (T_out - t_hi) * V), compute_dtype)
            if t_hi > t_lo:                     # shifted copy + in-kernel cast
                src_lo = (t_lo + k - pad) * V
                src_hi = (t_hi + k - pad) * V
                stacked_ref[rows, t_lo * V: t_hi * V] = (
                    x_ref[0, :, src_lo:src_hi].astype(compute_dtype))

    # Single full-depth (K*C_in) MXU contraction; BN shift + cast in epilogue
    # (no accumulator init ahead of the matmul).
    acc = jnp.dot(w_ref[...], stacked_ref[...],
                  preferred_element_type=jnp.float32)
    o_ref[0] = (acc + shift_ref[...]).astype(o_ref.dtype)


def unit_tcn_forward(x_nchw, weight, bias, gamma, beta, run_mean, run_var, *,
                     eps=1e-5, stride=1, compute_dtype=jnp.float32,
                     block_cout=None, out_dtype=None):
    """unit_tcn forward: y = BN(Conv2d(x, (K,1), pad=((K-1)//2, 0), bias)).

    x_nchw: (N, C_in, T, V); weight: (C_out, C_in, K, 1) (PyTorch OIHW layout).
    Eval-mode BatchNorm (running stats); dropout p=0 -> identity.
    """
    if stride != 1:
        # TODO(synk): stride > 1 temporal stride not implemented in the kernel.
        raise NotImplementedError("unit_tcn Pallas kernel supports stride=1 only")

    N, C_in, T, V = x_nchw.shape
    C_out, _, K, _ = weight.shape
    pad = (K - 1) // 2
    T_out = T + 2 * pad - K + 1           # == T for odd K, T-1 for even K
    out_dtype = x_nchw.dtype if out_dtype is None else out_dtype

    # --- C_out tiling (second, "arbitrary" grid axis). For small models a
    # single tile keeps the launch to one grid step per batch element.
    if block_cout is None:
        block_cout = C_out if (C_out <= 256 or C_out % 128) else 128
    assert C_out % block_cout == 0, (C_out, block_cout)
    assert block_cout == C_out or block_cout % 8 == 0, block_cout
    n_c = C_out // block_cout

    # --- BN folding: scale into the conv weights, shift into the epilogue.
    inv_std = lax.rsqrt(run_var.astype(jnp.float32) + eps)
    scale = gamma.astype(jnp.float32) * inv_std                       # (C_out,)
    shift = (beta.astype(jnp.float32)
             - run_mean.astype(jnp.float32) * scale
             + bias.astype(jnp.float32) * scale)                      # (C_out,)

    # (C_out, C_in, K) -> (C_out, K, C_in) -> (C_out, K*C_in), tap-major columns
    # to match the stacked RHS row order k*C_in + c.
    w2 = jnp.transpose(weight[..., 0], (0, 2, 1)).astype(jnp.float32)
    w2 = (w2 * scale[:, None, None]).reshape(C_out, K * C_in).astype(compute_dtype)
    shift2 = shift.reshape(C_out, 1)

    # --- Input stays un-padded & un-cast in HBM; flatten (T, V) onto lanes
    # (free, contiguous reshape). Padding + cast happen inside the kernel.
    x_flat = x_nchw.reshape(N, C_in, T * V)

    # --- Explicit VMEM budget: double-buffered blocks + stacked scratch, with
    # headroom, capped below v7x's 64 MiB physical VMEM.
    in_b = jnp.dtype(x_nchw.dtype).itemsize
    cp_b = jnp.dtype(compute_dtype).itemsize
    out_b = jnp.dtype(out_dtype).itemsize
    step_bytes = (2 * (C_in * T * V * in_b
                       + block_cout * K * C_in * cp_b
                       + block_cout * 4
                       + block_cout * T_out * V * out_b)
                  + K * C_in * T_out * V * cp_b)
    vmem_limit = int(min(max(2 * step_bytes + (4 << 20), 16 << 20), 48 << 20))

    kernel = functools.partial(_tcn_bn_kernel, K=K, V=V, pad=pad, T=T,
                               T_out=T_out, C_in=C_in,
                               compute_dtype=compute_dtype)

    out_flat = pl.pallas_call(
        kernel,
        out_shape=jax.ShapeDtypeStruct((N, C_out, T_out * V), out_dtype),
        grid=(N, n_c),
        in_specs=[
            pl.BlockSpec((1, C_in, T * V), lambda n, c: (n, 0, 0)),
            pl.BlockSpec((block_cout, K * C_in), lambda n, c: (c, 0)),
            pl.BlockSpec((block_cout, 1), lambda n, c: (c, 0)),
        ],
        out_specs=pl.BlockSpec((1, block_cout, T_out * V),
                               lambda n, c: (n, c, 0)),
        scratch_shapes=[pltpu.VMEM((K * C_in, T_out * V), compute_dtype)],
        compiler_params=pltpu.CompilerParams(
            dimension_semantics=("parallel", "arbitrary"),
            vmem_limit_bytes=vmem_limit),
    )(x_flat, w2, shift2)

    # Free reshape back to NCHW: (N, C_out, T_out, V).
    return out_flat.reshape(N, C_out, T_out, V)


def reference_forward(x_nchw, weight, bias, gamma, beta, run_mean, run_var,
                      *, eps=1e-5):
    K = weight.shape[2]
    pad = (K - 1) // 2
    y = lax.conv_general_dilated(
        x_nchw, weight, window_strides=(1, 1),
        padding=[(pad, pad), (0, 0)],
        dimension_numbers=("NCHW", "OIHW", "NCHW"))
    y = y + bias[None, :, None, None]
    inv_std = 1.0 / jnp.sqrt(run_var + eps)
    return (y - run_mean[None, :, None, None]) * (gamma * inv_std)[None, :, None, None] \
        + beta[None, :, None, None]


if __name__ == "__main__":
    # Small shapes: N=2, D_in=4, D_out=8, T=16, V=16 joints, kernel_size=9.
    N, D_in, D_out, T, V, K = 2, 4, 8, 16, 16, 9

    key = jax.random.PRNGKey(0)
    k_x, k_w, k_b, k_g, k_bt, k_m, k_v = jax.random.split(key, 7)

    x = jax.random.normal(k_x, (N, D_in, T, V), jnp.float32)
    # conv_init-style deterministic init (kaiming-like scale), small bias noise.
    fan = D_in * K
    weight = jax.random.normal(k_w, (D_out, D_in, K, 1), jnp.float32) * (2.0 / fan) ** 0.5
    bias = jax.random.normal(k_b, (D_out,), jnp.float32) * 0.1
    gamma = 1.0 + 0.1 * jax.random.normal(k_g, (D_out,), jnp.float32)
    beta = 0.1 * jax.random.normal(k_bt, (D_out,), jnp.float32)
    run_mean = 0.1 * jax.random.normal(k_m, (D_out,), jnp.float32)
    run_var = jnp.abs(1.0 + 0.1 * jax.random.normal(k_v, (D_out,), jnp.float32))

    ref = jax.block_until_ready(
        reference_forward(x, weight, bias, gamma, beta, run_mean, run_var))

    # Exact f32 compute path.
    out_f32 = jax.block_until_ready(
        unit_tcn_forward(x, weight, bias, gamma, beta, run_mean, run_var,
                         compute_dtype=jnp.float32))
    assert out_f32.shape == (N, D_out, T, V), out_f32.shape
    np.testing.assert_allclose(np.asarray(out_f32), np.asarray(ref),
                               rtol=1e-5, atol=1e-5)

    # bf16 compute path (f32 accumulation, cast happens in-kernel).
    out_bf16 = jax.block_until_ready(
        unit_tcn_forward(x, weight, bias, gamma, beta, run_mean, run_var,
                         compute_dtype=jnp.bfloat16))
    assert out_bf16.shape == (N, D_out, T, V), out_bf16.shape
    np.testing.assert_allclose(np.asarray(out_bf16), np.asarray(ref),
                               rtol=5e-2, atol=5e-2)

    print("KERNEL_OK")
</pallas_src>

<mosaic_0001>
module attributes {stable_mosaic.version = 11 : i64} {
  func.func @_tcn_bn_kernel(%arg0: i32, %arg1: i32, %arg2: memref<1x4x256xf32, #tpu.memory_space<vmem>>, %arg3: memref<8x36xf32, #tpu.memory_space<vmem>>, %arg4: memref<8x1xf32, #tpu.memory_space<vmem>>, %arg5: memref<1x8x256xf32, #tpu.memory_space<vmem>>, %arg6: memref<36x256xf32, #tpu.memory_space<vmem>>) attributes {dimension_semantics = [#tpu.dimension_semantics<parallel>, #tpu.dimension_semantics<arbitrary>], iteration_bounds = array<i64: 2, 1>, scalar_prefetch = 0 : i64, scratch_operands = 1 : i64, tpu.core_type = #tpu.core_type<tc>, window_params = [{transform_indices = @transform_0, window_bounds = array<i64: 1, 4, 256>}, {transform_indices = @transform_1, window_bounds = array<i64: 8, 36>}, {transform_indices = @transform_2, window_bounds = array<i64: 8, 1>}, {transform_indices = @transform_3, window_bounds = array<i64: 1, 8, 256>}]} {
    %c0_i32 = arith.constant 0 : i32
    %0 = arith.cmpi eq, %arg1, %c0_i32 : i32
    %1 = arith.extui %0 : i1 to i32
    %c0_i32_0 = arith.constant 0 : i32
    %2 = arith.cmpi ne, %1, %c0_i32_0 : i32
    scf.if %2 {
      %cst_9 = arith.constant 0.000000e+00 : f32
      %12 = vector.broadcast %cst_9 : f32 to vector<4x64xf32>
      %c0_10 = arith.constant 0 : index
      %c0_11 = arith.constant 0 : index
      %13 = vector.load %arg6[%c0_10, %c0_11] : memref<36x256xf32, #tpu.memory_space<vmem>>, vector<4x64xf32>
      tpu.vector_store %arg6[%c0_10, %c0_11], %12 {strides = array<i32>} : memref<36x256xf32, #tpu.memory_space<vmem>>, vector<4x64xf32>,
      %c0_12 = arith.constant 0 : index
      %c0_13 = arith.constant 0 : index
      %c0_14 = arith.constant 0 : index
      %14 = vector.load %arg2[%c0_12, %c0_13, %c0_14] : memref<1x4x256xf32, #tpu.memory_space<vmem>>, vector<1x4x192xf32>
      %15 = vector.shape_cast %14 : vector<1x4x192xf32> to vector<4x192xf32>
      %c0_15 = arith.constant 0 : index
      %c64 = arith.constant 64 : index
      %16 = vector.load %arg6[%c0_15, %c64] : memref<36x256xf32, #tpu.memory_space<vmem>>, vector<4x192xf32>
      tpu.vector_store %arg6[%c0_15, %c64], %15 {strides = array<i32>} : memref<36x256xf32, #tpu.memory_space<vmem>>, vector<4x192xf32>,
      %cst_16 = arith.constant 0.000000e+00 : f32
      %17 = vector.broadcast %cst_16 : f32 to vector<4x48xf32>
      %c4 = arith.constant 4 : index
      %c0_17 = arith.constant 0 : index
      %18 = vector.load %arg6[%c4, %c0_17] : memref<36x256xf32, #tpu.memory_space<vmem>>, vector<4x48xf32>
      tpu.vector_store %arg6[%c4, %c0_17], %17 {strides = array<i32>} : memref<36x256xf32, #tpu.memory_space<vmem>>, vector<4x48xf32>,
      %c0_18 = arith.constant 0 : index
      %c0_19 = arith.constant 0 : index
      %c0_20 = arith.constant 0 : index
      %19 = vector.load %arg2[%c0_18, %c0_19, %c0_20] : memref<1x4x256xf32, #tpu.memory_space<vmem>>, vector<1x4x208xf32>
      %20 = vector.shape_cast %19 : vector<1x4x208xf32> to vector<4x208xf32>
      %c4_21 = arith.constant 4 : index
      %c48 = arith.constant 48 : index
      %21 = vector.load %arg6[%c4_21, %c48] : memref<36x256xf32, #tpu.memory_space<vmem>>, vector<4x208xf32>
      tpu.vector_store %arg6[%c4_21, %c48], %20 {strides = array<i32>} : memref<36x256xf32, #tpu.memory_space<vmem>>, vector<4x208xf32>,
      %cst_22 = arith.constant 0.000000e+00 : f32
      %22 = vector.broadcast %cst_22 : f32 to vector<4x32xf32>
      %c8 = arith.constant 8 : index
      %c0_23 = arith.constant 0 : index
      %23 = vector.load %arg6[%c8, %c0_23] : memref<36x256xf32, #tpu.memory_space<vmem>>, vector<4x32xf32>
      tpu.vector_store %arg6[%c8, %c0_23], %22 {strides = array<i32>} : memref<36x256xf32, #tpu.memory_space<vmem>>, vector<4x32xf32>,
      %c0_24 = arith.constant 0 : index
      %c0_25 = arith.constant 0 : index
      %c0_26 = arith.constant 0 : index
      %24 = vector.load %arg2[%c0_24, %c0_25, %c0_26] : memref<1x4x256xf32, #tpu.memory_space<vmem>>, vector<1x4x224xf32>
      %25 = vector.shape_cast %24 : vector<1x4x224xf32> to vector<4x224xf32>
      %c8_27 = arith.constant 8 : index
      %c32 = arith.constant 32 : index
      %26 = vector.load %arg6[%c8_27, %c32] : memref<36x256xf32, #tpu.memory_space<vmem>>, vector<4x224xf32>
      tpu.vector_store %arg6[%c8_27, %c32], %25 {strides = array<i32>} : memref<36x256xf32, #tpu.memory_space<vmem>>, vector<4x224xf32>,
      %cst_28 = arith.constant 0.000000e+00 : f32
      %27 = vector.broadcast %cst_28 : f32 to vector<4x16xf32>
      %c12 = arith.constant 12 : index
      %c0_29 = arith.constant 0 : index
      %28 = vector.load %arg6[%c12, %c0_29] : memref<36x256xf32, #tpu.memory_space<vmem>>, vector<4x16xf32>
      tpu.vector_store %arg6[%c12, %c0_29], %27 {strides = array<i32>} : memref<36x256xf32, #tpu.memory_space<vmem>>, vector<4x16xf32>,
      %c0_30 = arith.constant 0 : index
      %c0_31 = arith.constant 0 : index
      %c0_32 = arith.constant 0 : index
      %29 = vector.load %arg2[%c0_30, %c0_31, %c0_32] : memref<1x4x256xf32, #tpu.memory_space<vmem>>, vector<1x4x240xf32>
      %30 = vector.shape_cast %29 : vector<1x4x240xf32> to vector<4x240xf32>
      %c12_33 = arith.constant 12 : index
      %c16 = arith.constant 16 : index
      %31 = vector.load %arg6[%c12_33, %c16] : memref<36x256xf32, #tpu.memory_space<vmem>>, vector<4x240xf32>
      tpu.vector_store %arg6[%c12_33, %c16], %30 {strides = array<i32>} : memref<36x256xf32, #tpu.memory_space<vmem>>, vector<4x240xf32>,
      %c0_34 = arith.constant 0 : index
      %c0_35 = arith.constant 0 : index
      %c0_36 = arith.constant 0 : index
      %32 = vector.load %arg2[%c0_34, %c0_35, %c0_36] : memref<1x4x256xf32, #tpu.memory_space<vmem>>, vector<1x4x256xf32>
      %33 = vector.shape_cast %32 : vector<1x4x256xf32> to vector<4x256xf32>
      %c16_37 = arith.constant 16 : index
      %c0_38 = arith.constant 0 : index
      %34 = vector.load %arg6[%c16_37, %c0_38] : memref<36x256xf32, #tpu.memory_space<vmem>>, vector<4x256xf32>
      tpu.vector_store %arg6[%c16_37, %c0_38], %33 {strides = array<i32>} : memref<36x256xf32, #tpu.memory_space<vmem>>, vector<4x256xf32>,
      %cst_39 = arith.constant 0.000000e+00 : f32
      %35 = vector.broadcast %cst_39 : f32 to vector<4x16xf32>
      %c20 = arith.constant 20 : index
      %c240 = arith.constant 240 : index
      %36 = vector.load %arg6[%c20, %c240] : memref<36x256xf32, #tpu.memory_space<vmem>>, vector<4x16xf32>
      tpu.vector_store %arg6[%c20, %c240], %35 {strides = array<i32>} : memref<36x256xf32, #tpu.memory_space<vmem>>, vector<4x16xf32>,
      %c0_40 = arith.constant 0 : index
      %c0_41 = arith.constant 0 : index
      %c16_42 = arith.constant 16 : index
      %37 = vector.load %arg2[%c0_40, %c0_41, %c16_42] : memref<1x4x256xf32, #tpu.memory_space<vmem>>, vector<1x4x240xf32>
      %38 = vector.shape_cast %37 : vector<1x4x240xf32> to vector<4x240xf32>
      %c20_43 = arith.constant 20 : index
      %c0_44 = arith.constant 0 : index
      %39 = vector.load %arg6[%c20_43, %c0_44] : memref<36x256xf32, #tpu.memory_space<vmem>>, vector<4x240xf32>
      tpu.vector_store %arg6[%c20_43, %c0_44], %38 {strides = array<i32>} : memref<36x256xf32, #tpu.memory_space<vmem>>, vector<4x240xf32>,
      %cst_45 = arith.constant 0.000000e+00 : f32
      %40 = vector.broadcast %cst_45 : f32 to vector<4x32xf32>
      %c24 = arith.constant 24 : index
      %c224 = arith.constant 224 : index
      %41 = vector.load %arg6[%c24, %c224] : memref<36x256xf32, #tpu.memory_space<vmem>>, vector<4x32xf32>
      tpu.vector_store %arg6[%c24, %c224], %40 {strides = array<i32>} : memref<36x256xf32, #tpu.memory_space<vmem>>, vector<4x32xf32>,
      %c0_46 = arith.constant 0 : index
      %c0_47 = arith.constant 0 : index
      %c32_48 = arith.constant 32 : index
      %42 = vector.load %arg2[%c0_46, %c0_47, %c32_48] : memref<1x4x256xf32, #tpu.memory_space<vmem>>, vector<1x4x224xf32>
      %43 = vector.shape_cast %42 : vector<1x4x224xf32> to vector<4x224xf32>
      %c24_49 = arith.constant 24 : index
      %c0_50 = arith.constant 0 : index
      %44 = vector.load %arg6[%c24_49, %c0_50] : memref<36x256xf32, #tpu.memory_space<vmem>>, vector<4x224xf32>
      tpu.vector_store %arg6[%c24_49, %c0_50], %43 {strides = array<i32>} : memref<36x256xf32, #tpu.memory_space<vmem>>, vector<4x224xf32>,
      %cst_51 = arith.constant 0.000000e+00 : f32
      %45 = vector.broadcast %cst_51 : f32 to vector<4x48xf32>
      %c28 = arith.constant 28 : index
      %c208 = arith.constant 208 : index
      %46 = vector.load %arg6[%c28, %c208] : memref<36x256xf32, #tpu.memory_space<vmem>>, vector<4x48xf32>
      tpu.vector_store %arg6[%c28, %c208], %45 {strides = array<i32>} : memref<36x256xf32, #tpu.memory_space<vmem>>, vector<4x48xf32>,
      %c0_52 = arith.constant 0 : index
      %c0_53 = arith.constant 0 : index
      %c48_54 = arith.constant 48 : index
      %47 = vector.load %arg2[%c0_52, %c0_53, %c48_54] : memref<1x4x256xf32, #tpu.memory_space<vmem>>, vector<1x4x208xf32>
      %48 = vector.shape_cast %47 : vector<1x4x208xf32> to vector<4x208xf32>
      %c28_55 = arith.constant 28 : index
      %c0_56 = arith.constant 0 : index
      %49 = vector.load %arg6[%c28_55, %c0_56] : memref<36x256xf32, #tpu.memory_space<vmem>>, vector<4x208xf32>
      tpu.vector_store %arg6[%c28_55, %c0_56], %48 {strides = array<i32>} : memref<36x256xf32, #tpu.memory_space<vmem>>, vector<4x208xf32>,
      %cst_57 = arith.constant 0.000000e+00 : f32
      %50 = vector.broadcast %cst_57 : f32 to vector<4x64xf32>
      %c32_58 = arith.constant 32 : index
      %c192 = arith.constant 192 : index
      %51 = vector.load %arg6[%c32_58, %c192] : memref<36x256xf32, #tpu.memory_space<vmem>>, vector<4x64xf32>
      tpu.vector_store %arg6[%c32_58, %c192], %50 {strides = array<i32>} : memref<36x256xf32, #tpu.memory_space<vmem>>, vector<4x64xf32>,
      %c0_59 = arith.constant 0 : index
      %c0_60 = arith.constant 0 : index
      %c64_61 = arith.constant 64 : index
      %52 = vector.load %arg2[%c0_59, %c0_60, %c64_61] : memref<1x4x256xf32, #tpu.memory_space<vmem>>, vector<1x4x192xf32>
      %53 = vector.shape_cast %52 : vector<1x4x192xf32> to vector<4x192xf32>
      %c32_62 = arith.constant 32 : index
      %c0_63 = arith.constant 0 : index
      %54 = vector.load %arg6[%c32_62, %c0_63] : memref<36x256xf32, #tpu.memory_space<vmem>>, vector<4x192xf32>
      tpu.vector_store %arg6[%c32_62, %c0_63], %53 {strides = array<i32>} : memref<36x256xf32, #tpu.memory_space<vmem>>, vector<4x192xf32>,
    } else {
    }
    %c0 = arith.constant 0 : index
    %c0_1 = arith.constant 0 : index
    %3 = vector.load %arg3[%c0, %c0_1] : memref<8x36xf32, #tpu.memory_space<vmem>>, vector<8x36xf32>
    %c0_2 = arith.constant 0 : index
    %c0_3 = arith.constant 0 : index
    %4 = vector.load %arg6[%c0_2, %c0_3] : memref<36x256xf32, #tpu.memory_space<vmem>>, vector<36x256xf32>
    %cst = arith.constant dense<0.000000e+00> : vector<8x256xf32>
    %5 = tpu.matmul %3, %4, %cst {dimension_numbers = #tpu.dot_dimension_numbers<[1], [0], [0], [1], [0, 0, 1, 1], [], []>} : vector<8x36xf32>, vector<36x256xf32>, vector<8x256xf32> -> vector<8x256xf32>
    %c0_4 = arith.constant 0 : index
    %c0_5 = arith.constant 0 : index
    %6 = vector.load %arg4[%c0_4, %c0_5] : memref<8x1xf32, #tpu.memory_space<vmem>>, vector<8x1xf32>
    %7 = vector.broadcast %6 : vector<8x1xf32> to vector<8x256xf32>
    %8 = arith.addf %5, %7 : vector<8x256xf32>
    %c0_6 = arith.constant 0 : index
    %c0_7 = arith.constant 0 : index
    %c0_8 = arith.constant 0 : index
    %9 = vector.load %arg5[%c0_6, %c0_7, %c0_8] : memref<1x8x256xf32, #tpu.memory_space<vmem>>, vector<1x8x256xf32>
    %10 = vector.shape_cast %9 : vector<1x8x256xf32> to vector<8x256xf32>
    %11 = vector.shape_cast %8 : vector<8x256xf32> to vector<1x8x256xf32>
    tpu.vector_store %arg5[%c0_6, %c0_7, %c0_8], %11 {strides = array<i32>} : memref<1x8x256xf32, #tpu.memory_space<vmem>>, vector<1x8x256xf32>,
    return
  }
  func.func @transform_0(%arg0: i32, %arg1: i32) -> (i32, i32, i32) {
    %c0_i32 = arith.constant 0 : i32
    %c0_i32_0 = arith.constant 0 : i32
    %c0_i32_1 = arith.constant 0 : i32
    return %arg0, %c0_i32, %c0_i32_0 : i32, i32, i32
  }
  func.func @transform_1(%arg0: i32, %arg1: i32) -> (i32, i32) {
    %c0_i32 = arith.constant 0 : i32
    %c0_i32_0 = arith.constant 0 : i32
    return %arg1, %c0_i32 : i32, i32
  }
  func.func @transform_2(%arg0: i32, %arg1: i32) -> (i32, i32) {
    %c0_i32 = arith.constant 0 : i32
    %c0_i32_0 = arith.constant 0 : i32
    return %arg1, %c0_i32 : i32, i32
  }
  func.func @transform_3(%arg0: i32, %arg1: i32) -> (i32, i32, i32) {
    %c0_i32 = arith.constant 0 : i32
    %c0_i32_0 = arith.constant 0 : i32
    return %arg0, %arg1, %c0_i32 : i32, i32, i32
  }
}

</mosaic_0001>

<llo_original>
// kernel: tpu_custom_call.1
$region0: #{tpu_custom_call.1}
  #allocation0 [shape = 'u32[]', space=smem, size = 0x4, offset = 0x4, fixed_abs, tag = 'smem constant byte address 0x4 - core index']
  #allocation1 [shape = 'u32[144,128]{1,0:T(1,128)}', space=vmem, size = 0x12000, scoped, tag = 'internal scratch']
  #allocation2 [shape = 'f32[36,256]{1,0:T(8,128)}', space=vmem, size = 0xa000, scoped, tag = 'scratch operand']
  %s0 = inlined_call_operand.hbm [shape: f32[2,4,256], index: 0, kind: input, shape index: {}]
  %s1 = inlined_call_operand.vmem [shape: f32[8,36], index: 1, kind: input, shape index: {}]
  %s2 = inlined_call_operand.vmem [shape: f32[8,1], index: 2, kind: input, shape index: {}]
  %s3 = inlined_call_operand.hbm [shape: f32[2,8,256], index: 3, kind: output, shape index: {}]
  %s4 = sld [smem:[#allocation0]]
  $region53: #{tpu_custom_call.1} parent=0
    _
  %s6 = ssub.s32 1, %s4
  %s7 = scalar_select 0, %s6, %s4
  $region1: #{tpu_custom_call.1} parent=0
    #allocation3 [shape = 'u8[8192]{0}', space=vmem, size = 0x2000, scoped, tag = 'input window, operand 0']
    #allocation4 [shape = 's32[2]{0}', space=sflag, size = 0x8, scoped, tag = 'scoped memory for tpu_custom_call.1']
    #allocation5 [shape = 's32[2]{0}', space=sflag, size = 0x8, scoped, tag = 'scoped memory for tpu_custom_call.1']
    #allocation6 [shape = 'u8[16384]{0}', space=vmem, size = 0x4000, scoped, tag = 'output window, operand 0']
    %8 = vsyncpa [#allocation4], 0
    %s9 = scalar_lea.sflag [#allocation4], 1
    %10 = vsyncpa %s9, 0
    %11 = vsyncpa [#allocation5], 0
    %s12 = scalar_lea.sflag [#allocation5], 1
    %13 = vsyncpa %s12, 0
    loop: start=0, step=1, limit=4
    $region2: #{tpu_custom_call.1} parent=1 // loop_pre_header
      _
    $region3: #{tpu_custom_call.1} parent=1 // loop_header
      %s15 = sphi 0, %s19
      %p16 = scmp.ge.s32.totalorder %s15, 4
      %s22 = sphi 0, %s34
      %s23 = sphi 0, %s30
      %s24 = sphi 0, %s22
      %s25 = sphi 0, %s23
      %s26 = sphi 0, %s24
      %s27 = sphi 0, %s25
      %s37 = sphi 0, %s39
      %s40 = sphi 0, %s37
      %s41 = sphi 0, %s40
      %s57 = sphi 0, %s41
      %s63 = sphi 0, %s65
      %s66 = sphi 0, %s63
      %s67 = sphi 0, %s66
      %s83 = sphi 0, %s67
      %s89 = sphi 0, %s91
      %s92 = sphi 0, %s89
      %s93 = sphi 0, %s92
      %s109 = sphi 0, %s93
      %s117 = sphi 0, %s119
      %s120 = sphi 0, %s117
      %s121 = sphi 0, %s120
      %s137 = sphi 0, %s121
    $region4: #{tpu_custom_call.1} parent=1 // loop_header_branch
      %18 = sbr.rel (%p16) target = $region8
    $region5: #{tpu_custom_call.1} parent=1 // loop_body
      %s20 = ssub.s32 %s15, 1
      %s21 = ssub.s32 %s15, 2
      %s28 = sadd.s32 1, %s23
      %p29 = scmp.ge.s32.totalorder %s28, 1
      %s30 = scalar_select %p29, 0, %s28
      %s31 = sadd.s32 1, %s22
      %s32 = scalar_select %p29, %s31, %s22
      %p33 = scmp.ge.s32.totalorder %s32, 2
      %s34 = scalar_select %p33, 0, %s32
      %s35 = ssub.s32 %s22, %s34
      %p36 = scmp.eq.s32.totalorder %s35, 0
      %s38 = sadd.s32 %s37, 1
      %s39 = scalar_select %p36, %s37, %s38
      %p42 = pneg %p36
      %p43 = scmp.eq.s32.totalorder %s15, 1
      %p44 = por %p42, %p43
      %p45 = scmp.ne.s32.totalorder %s37, %s40
      %p46 = scmp.eq.s32.totalorder %s15, 0
      %p47 = por %p45, %p46
      %p48 = scmp.ne.s32.totalorder %s37, %s40
      %p49 = scmp.eq.s32.totalorder %s20, 1
      %p50 = por %p48, %p49
      %p51 = scmp.ne.s32.totalorder %s40, %s41
      %p52 = scmp.eq.s32.totalorder %s20, 0
      %p53 = por %p51, %p52
      %p54 = scmp.ne.s32.totalorder %s40, %s41
      %p55 = scmp.eq.s32.totalorder %s21, 1
      %p56 = por %p54, %p55
      %p58 = scmp.ne.s32.totalorder %s41, %s57
      %p59 = scmp.eq.s32.totalorder %s21, 0
      %p60 = por %p58, %p59
      %s61 = ssub.s32 %s23, %s30
      %p62 = scmp.eq.s32.totalorder %s61, 0
      %s64 = sadd.s32 %s63, 1
      %s65 = scalar_select %p62, %s63, %s64
      %p68 = pneg %p62
      %p69 = scmp.eq.s32.totalorder %s15, 1
      %p70 = por %p68, %p69
      %p71 = scmp.ne.s32.totalorder %s63, %s66
      %p72 = scmp.eq.s32.totalorder %s15, 0
      %p73 = por %p71, %p72
      %p74 = scmp.ne.s32.totalorder %s63, %s66
      %p75 = scmp.eq.s32.totalorder %s20, 1
      %p76 = por %p74, %p75
      %p77 = scmp.ne.s32.totalorder %s66, %s67
      %p78 = scmp.eq.s32.totalorder %s20, 0
      %p79 = por %p77, %p78
      %p80 = scmp.ne.s32.totalorder %s66, %s67
      %p81 = scmp.eq.s32.totalorder %s21, 1
      %p82 = por %p80, %p81
      %p84 = scmp.ne.s32.totalorder %s67, %s83
      %p85 = scmp.eq.s32.totalorder %s21, 0
      %p86 = por %p84, %p85
      %s87 = ssub.s32 %s23, %s30
      %p88 = scmp.eq.s32.totalorder %s87, 0
      %s90 = sadd.s32 %s89, 1
      %s91 = scalar_select %p88, %s89, %s90
      %p94 = pneg %p88
      %p95 = scmp.eq.s32.totalorder %s15, 1
      %p96 = por %p94, %p95
      %p97 = scmp.ne.s32.totalorder %s89, %s92
      %p98 = scmp.eq.s32.totalorder %s15, 0
      %p99 = por %p97, %p98
      %p100 = scmp.ne.s32.totalorder %s89, %s92
      %p101 = scmp.eq.s32.totalorder %s20, 1
      %p102 = por %p100, %p101
      %p103 = scmp.ne.s32.totalorder %s92, %s93
      %p104 = scmp.eq.s32.totalorder %s20, 0
      %p105 = por %p103, %p104
      %p106 = scmp.ne.s32.totalorder %s92, %s93
      %p107 = scmp.eq.s32.totalorder %s21, 1
      %p108 = por %p106, %p107
      %p110 = scmp.ne.s32.totalorder %s93, %s109
      %p111 = scmp.eq.s32.totalorder %s21, 0
      %p112 = por %p110, %p111
      %s113 = ssub.s32 %s22, %s34
      %s114 = ssub.s32 %s23, %s30
      %s115 = sor.u32 %s113, %s114
      %p116 = scmp.eq.s32.totalorder %s115, 0
      %s118 = sadd.s32 %s117, 1
      %s119 = scalar_select %p116, %s117, %s118
      %p122 = pneg %p116
      %p123 = scmp.eq.s32.totalorder %s15, 1
      %p124 = por %p122, %p123
      %p125 = scmp.ne.s32.totalorder %s117, %s120
      %p126 = scmp.eq.s32.totalorder %s15, 0
      %p127 = por %p125, %p126
      %p128 = scmp.ne.s32.totalorder %s117, %s120
      %p129 = scmp.eq.s32.totalorder %s20, 1
      %p130 = por %p128, %p129
      %p131 = scmp.ne.s32.totalorder %s120, %s121
      %p132 = scmp.eq.s32.totalorder %s20, 0
      %p133 = por %p131, %p132
      %p134 = scmp.ne.s32.totalorder %s120, %s121
      %p135 = scmp.eq.s32.totalorder %s21, 1
      %p136 = por %p134, %p135
      %p138 = scmp.ne.s32.totalorder %s121, %s137
      %p139 = scmp.eq.s32.totalorder %s21, 0
      %p140 = por %p138, %p139
      %p141 = scmp.le.s32.totalorder 1, %s15
      %p142 = scmp.lt.s32.totalorder %s15, 3
      %p143 = pnand %p141, %p142
      %p144 = pneg %p143
      // Predicated region
      $region9: #{tpu_custom_call.1} parent=5 // pred_check
        _
      $region10: #{tpu_custom_call.1} parent=5 // pred_check_branch
        %146 = sbr.rel (%p143) target = $region12
      $region11: #{tpu_custom_call.1} parent=5 // pred_region
        %s147 = ssub.s32 %s15, 1
        // Predicated region
        $region13: #{tpu_custom_call.1} parent=11 // pred_check
          %p148 = pneg %p79
        $region14: #{tpu_custom_call.1} parent=11 // pred_check_branch
          %150 = sbr.rel (%p148) target = $region16
        $region15: #{tpu_custom_call.1} parent=11 // pred_region
          %p151 = scmp.lt.s32.totalorder %s25, 0
          %s152 = scalar_select %p151, %s25, 0
          %s153 = smul.addr %s152, 8
          %s154 = scalar_lea.vmem %s1, %s153
        $region16: #{tpu_custom_call.1} parent=11 // pred_fallthru
          _
        // Predicated region
        $region17: #{tpu_custom_call.1} parent=11 // pred_check
          %p155 = pneg %p105
        $region18: #{tpu_custom_call.1} parent=11 // pred_check_branch
          %157 = sbr.rel (%p155) target = $region20
        $region19: #{tpu_custom_call.1} parent=11 // pred_region
          %p158 = scmp.lt.s32.totalorder %s25, 0
          %s159 = scalar_select %p158, %s25, 0
          %s160 = smul.addr %s159, 8
          %s161 = scalar_lea.vmem %s2, %s160
        $region20: #{tpu_custom_call.1} parent=11 // pred_fallthru
          _
      $region12: #{tpu_custom_call.1} parent=5 // pred_fallthru
        _
      %p162 = scmp.lt.s32.totalorder %s15, 2
      // Predicated region
      $region21: #{tpu_custom_call.1} parent=5 // pred_check
        %p163 = pneg %p162
      $region22: #{tpu_custom_call.1} parent=5 // pred_check_branch
        %165 = sbr.rel (%p163) target = $region24
      $region23: #{tpu_custom_call.1} parent=5 // pred_region
        // Predicated region
        $region25: #{tpu_custom_call.1} parent=23 // pred_check
          %p166 = pneg %p47
        $region26: #{tpu_custom_call.1} parent=23 // pred_check_branch
          %168 = sbr.rel (%p166) target = $region28
        $region27: #{tpu_custom_call.1} parent=23 // pred_region
          %s169 = sand.u32 %s37, 1
          %s170 = scalar_lea.sflag [#allocation4], %s169
          %s171 = sand.u32 %s37, 1
          %s172 = smul.addr %s171, 8
          %s173 = scalar_lea.vmem [#allocation3], %s172
          %s175 = ssub.s32 128, 128
          %176 = vsyncadd %s170, %s175
          %s177 = smul.addr %s22, 2
          %s178 = smul.addr %s177, 64
          %s179 = scalar_lea.hbm %s0, %s178
          %s181 = sshll.u32 %s173, 4
          %s182 = int_to_ptr.vmem [resolvable:$true] %s181
          %184 = dma.hbm_to_vmem [thread:$0]  %s179, 128, %s182, %s170
        $region28: #{tpu_custom_call.1} parent=23 // pred_fallthru
          _
      $region24: #{tpu_custom_call.1} parent=5 // pred_fallthru
        _
      %p185 = scmp.le.s32.totalorder 1, %s15
      %p186 = scmp.lt.s32.totalorder %s15, 3
      %p187 = pnand %p185, %p186
      %p188 = pneg %p187
      // Predicated region
      $region29: #{tpu_custom_call.1} parent=5 // pred_check
        _
      $region30: #{tpu_custom_call.1} parent=5 // pred_check_branch
        %190 = sbr.rel (%p187) target = $region32
      $region31: #{tpu_custom_call.1} parent=5 // pred_region
        %s191 = ssub.s32 %s15, 1
        %s192 = sand.u32 %s40, 1
        %s193 = scalar_lea.sflag [#allocation4], %s192
        %s194 = sand.u32 %s40, 1
        %s195 = smul.addr %s194, 8
        %s196 = scalar_lea.vmem [#allocation3], %s195
        // Predicated region
        $region33: #{tpu_custom_call.1} parent=31 // pred_check
          %p197 = pneg %p53
        $region34: #{tpu_custom_call.1} parent=31 // pred_check_branch
          %199 = sbr.rel (%p197) target = $region36
        $region35: #{tpu_custom_call.1} parent=31 // pred_region
          %200 = dma.done %s193, 128
        $region36: #{tpu_custom_call.1} parent=31 // pred_fallthru
          _
        %s201 = sand.u32 %s40, 1
        %s202 = scalar_lea.sflag [#allocation4], %s201
        %s203 = sand.u32 %s40, 1
        %s204 = smul.addr %s203, 8
        %s205 = scalar_lea.vmem [#allocation3], %s204
        %p206 = pneg %p53
        %p207 = pneg %p50
        %p208 = scmp.lt.s32.totalorder %s25, 0
        %s209 = scalar_select %p208, %s25, 0
        %s210 = smul.addr %s209, 8
        %s211 = scalar_lea.vmem %s1, %s210
        %p212 = pneg %p79
        %p213 = pneg %p76
        %p214 = scmp.lt.s32.totalorder %s25, 0
        %s215 = scalar_select %p214, %s25, 0
        %s216 = smul.addr %s215, 8
        %s217 = scalar_lea.vmem %s2, %s216
        %p218 = pneg %p105
        %p219 = pneg %p102
        %p220 = pneg %p133
        %p221 = pneg %p130
        %s222 = sand.u32 %s120, 1
        %s223 = scalar_lea.sflag [#allocation5], %s222
        %s224 = sand.u32 %s120, 1
        %s225 = smul.addr %s224, 16
        %s226 = scalar_lea.vmem [#allocation6], %s225
        %p227 = scmp.lt.s32.totalorder %s25, 0
        %s228 = scalar_select %p227, %s25, 0
        %s229 = smul.addr %s228, 8
        %s230 = scalar_lea.vmem %s1, %s229
        %p231 = scmp.lt.s32.totalorder %s25, 0
        %s232 = scalar_select %p231, %s25, 0
        %s233 = smul.addr %s232, 8
        %s234 = scalar_lea.vmem %s2, %s233
        %p235 = scmp.eq.s32.totalorder %s25, 0
        // Predicated region
        $region37: #{tpu_custom_call.1} parent=31 // pred_check
          %p236 = pneg %p235
        $region38: #{tpu_custom_call.1} parent=31 // pred_check_branch
          %238 = sbr.rel (%p236) target = $region40
        $region39: #{tpu_custom_call.1} parent=31 // pred_region
          %vm239 = vcmask 519168
          %240 = vst.msk [vmem:[#allocation2] sm:$0xf] %vm239, 0.0
          %v241 = vld [vmem:[%s196] sm:$0xff]
          %v243 = vcombine.high %v241, %v241
          %244 = vrot.lane.b32.xlu0 %v241, 64
          %v245 = vpop.permute.xlu0 %244
          %246 = vrot.lane.b32.xlu0 %v243, 64
          %v247 = vpop.permute.xlu0 %246
          %vm248 = vcmask 523264
          %v249 = vsel %vm248, %v245, %v247
          %vm252 = vcmask 1043968
          %253 = vst.msk [vmem:[#allocation2] sm:$0xf] %vm252, %v245
          %254 = vst [vmem:[#allocation2 + $0x8] sm:$0xf] %v249
          %vm255 = vcmask 392196
          %256 = vst.msk [vmem:[#allocation2] sm:$0xf0] %vm255, 0.0
          %v257 = vld [vmem:[%s196] sm:$0xff]
          %v259 = vcombine.low %v257, %v257
          %260 = vrot.lane.b32.xlu0 %v259, 48
          %v261 = vpop.permute.xlu0 %260
          %262 = vrot.lane.b32.xlu0 %v257, 48
          %v263 = vpop.permute.xlu0 %262
          %vm264 = vcmask 392192
          %v265 = vsel %vm264, %v261, %v263
          %vm268 = vcmask 1047940
          %269 = vst.msk [vmem:[#allocation2] sm:$0xf0] %vm268, %v261
          %270 = vst [vmem:[#allocation2 + $0x8] sm:$0xf0] %v265
          %vm271 = vcmask 257024
          %272 = vst.msk [vmem:[#allocation2 + $0x10] sm:$0xf] %vm271, 0.0
          %v273 = vld [vmem:[%s196] sm:$0xff]
          %v275 = vcombine.high %v273, %v273
          %276 = vrot.lane.b32.xlu0 %v273, 32
          %v277 = vpop.permute.xlu0 %276
          %278 = vrot.lane.b32.xlu0 %v275, 32
          %v279 = vpop.permute.xlu0 %278
          %vm280 = vcmask 261120
          %v281 = vsel %vm280, %v277, %v279
          %vm284 = vcmask 1043712
          %285 = vst.msk [vmem:[#allocation2 + $0x10] sm:$0xf] %vm284, %v277
          %286 = vst [vmem:[#allocation2 + $0x18] sm:$0xf] %v281
          %vm287 = vcmask 130052
          %288 = vst.msk [vmem:[#allocation2 + $0x10] sm:$0xf0] %vm287, 0.0
          %v289 = vld [vmem:[%s196] sm:$0xff]
          %v291 = vcombine.low %v289, %v289
          %292 = vrot.lane.b32.xlu0 %v291, 16
          %v293 = vpop.permute.xlu0 %292
          %294 = vrot.lane.b32.xlu0 %v289, 16
          %v295 = vpop.permute.xlu0 %294
          %vm296 = vcmask 130048
          %v297 = vsel %vm296, %v293, %v295
          %vm300 = vcmask 1047684
          %301 = vst.msk [vmem:[#allocation2 + $0x10] sm:$0xf0] %vm300, %v293
          %302 = vst [vmem:[#allocation2 + $0x18] sm:$0xf0] %v297
          %v303 = vld [vmem:[%s196] sm:$0xff]
          %v305 = vcombine.high %v303, %v303
          %307 = vst [vmem:[#allocation2 + $0x20] sm:$0xf] %v303
          %308 = vst [vmem:[#allocation2 + $0x28] sm:$0xf] %v305
          %vm309 = vcmask 1048452
          %310 = vst.msk [vmem:[#allocation2 + $0x28] sm:$0xf0] %vm309, 0.0
          %v311 = vld [vmem:[%s196] sm:$0xff]
          %v313 = vcombine.low %v311, %v311
          %314 = vrot.lane.b32.xlu0 %v313, 112
          %v315 = vpop.permute.xlu0 %314
          %316 = vrot.lane.b32.xlu0 %v311, 112
          %v317 = vpop.permute.xlu0 %316
          %vm318 = vcmask 916480
          %v319 = vsel %vm318, %v315, %v317
          %322 = vst [vmem:[#allocation2 + $0x20] sm:$0xf0] %v319
          %vm323 = vcmask 916484
          %324 = vst.msk [vmem:[#allocation2 + $0x28] sm:$0xf0] %vm323, %v317
          %vm325 = vcmask 1044224
          %326 = vst.msk [vmem:[#allocation2 + $0x38] sm:$0xf] %vm325, 0.0
          %v327 = vld [vmem:[%s196] sm:$0xff]
          %v329 = vcombine.high %v327, %v327
          %330 = vrot.lane.b32.xlu0 %v327, 96
          %v331 = vpop.permute.xlu0 %330
          %332 = vrot.lane.b32.xlu0 %v329, 96
          %v333 = vpop.permute.xlu0 %332
          %vm334 = vcmask 785408
          %v335 = vsel %vm334, %v331, %v333
          %338 = vst [vmem:[#allocation2 + $0x30] sm:$0xf] %v335
          %vm339 = vcmask 781312
          %340 = vst.msk [vmem:[#allocation2 + $0x38] sm:$0xf] %vm339, %v333
          %vm341 = vcmask 1048196
          %342 = vst.msk [vmem:[#allocation2 + $0x38] sm:$0xf0] %vm341, 0.0
          %v343 = vld [vmem:[%s196] sm:$0xff]
          %v345 = vcombine.low %v343, %v343
          %346 = vrot.lane.b32.xlu0 %v345, 80
          %v347 = vpop.permute.xlu0 %346
          %348 = vrot.lane.b32.xlu0 %v343, 80
          %v349 = vpop.permute.xlu0 %348
          %vm350 = vcmask 654336
          %v351 = vsel %vm350, %v347, %v349
          %354 = vst [vmem:[#allocation2 + $0x30] sm:$0xf0] %v351
          %vm355 = vcmask 654340
          %356 = vst.msk [vmem:[#allocation2 + $0x38] sm:$0xf0] %vm355, %v349
          %357 = vst.msk [vmem:[#allocation2 + $0x48] sm:$0xf] %vm252, 0.0
          %v358 = vld [vmem:[%s196] sm:$0xff]
          %v360 = vcombine.high %v358, %v358
          %361 = vrot.lane.b32.xlu0 %v358, 64
          %v362 = vpop.permute.xlu0 %361
          %363 = vrot.lane.b32.xlu0 %v360, 64
          %v364 = vpop.permute.xlu0 %363
          %v365 = vsel %vm248, %v362, %v364
          %368 = vst [vmem:[#allocation2 + $0x40] sm:$0xf] %v365
          %369 = vst.msk [vmem:[#allocation2 + $0x48] sm:$0xf] %vm239, %v364
        $region40: #{tpu_custom_call.1} parent=31 // pred_fallthru
          _
        %v370 = vld [vmem:[%s230] sm:$0xff]
        %v371 = vld [vmem:[#allocation2] sm:$0xff]
        %v372 = vld [vmem:[#allocation2 + $0x8] sm:$0xff]
        %v373 = vld [vmem:[#allocation2 + $0x10] sm:$0xff]
        %v374 = vld [vmem:[#allocation2 + $0x18] sm:$0xff]
        %v375 = vld [vmem:[#allocation2 + $0x20] sm:$0xff]
        %v376 = vld [vmem:[#allocation2 + $0x28] sm:$0xff]
        %v377 = vld [vmem:[#allocation2 + $0x30] sm:$0xff]
        %v378 = vld [vmem:[#allocation2 + $0x38] sm:$0xff]
        %v379 = vld [vmem:[#allocation2 + $0x40] sm:$0xf]
        %v380 = vld [vmem:[#allocation2 + $0x48] sm:$0xf]
        %v381 = vld [vmem:[%s234] sm:$0xff]
        %383 = vset.pattern.permute.xlu0 0
        %384 = vperm.xlu0 %383, %v381
        %v385 = vpop.permute.xlu0 %384
        %vm387 = vcmask 293888
        %v389 = vsel %vm387, %v370, 0
        %vm391 = vcmask 1043456
        %v393 = vsel %vm391, %v379, 0
        %v396 = vsel %vm391, %v380, 0
        %398 = vmatprep.subr.mxu0 %v372
        %399 = vmatpush1.msra.mxu0 %v371
        %400 = vmatprep.subr.mxu0 %v374
        %401 = vmatpush1.msra.mxu0 %v373
        %402 = vmatprep.subr.mxu0 %v376
        %403 = vmatpush1.msra.mxu0 %v375
        %404 = vmatprep.subr.mxu0 %v378
        %405 = vmatpush1.msra.mxu0 %v377
        %406 = vmatprep.subr.mxu0 %v396
        %407 = vmatpush1.msra.mxu0 %v393
        %408 = vmatprep.subr.mxu0 0.0
        %409 = vmatpush1.msra.mxu0 0.0
        %410 = vmatprep.subr.mxu0 0.0
        %411 = vmatpush1.msra.mxu0 0.0
        %412 = vmatprep.subr.mxu0 0.0
        %413 = vmatpush1.msra.mxu0 0.0
        %414 = vmatprep.subr.mxu0 0.0
        %415 = vmatpush1.msra.mxu0 0.0
        %416 = vmatprep.subr.mxu0 0.0
        %417 = vmatpush1.msra.mxu0 0.0
        %418 = vmatprep.subr.mxu0 0.0
        %419 = vmatpush1.msra.mxu0 0.0
        %420 = vmatprep.subr.mxu0 0.0
        %421 = vmatpush1.msra.mxu0 0.0
        %422 = vmatprep.subr.mxu0 0.0
        %423 = vmatpush1.msra.mxu0 0.0
        %424 = vmatprep.subr.mxu0 0.0
        %425 = vmatpush1.msra.mxu0 0.0
        %426 = vmatprep.subr.mxu0 0.0
        %427 = vmatpush1.msra.mxu0 0.0
        %428 = vmatprep.subr.mxu0 0.0
        %429 = vmatpush1.msra.mxu0 0.0
        %430 = vmatprep.subr.mxu0 0.0
        %431 = vmatpush1.msra.mxu0 0.0
        %432 = vmatprep.subr.mxu0 0.0
        %433 = vmatpush1.msra.mxu0 0.0
        %434 = vmatprep.subr.mxu0 0.0
        %435 = vmatpush1.msra.mxu0 0.0
        %436 = vmatprep.subr.mxu0 0.0
        %437 = vmatpush1.msra.mxu0 0.0
        %438 = vmatprep.subr.mxu0 0.0
        %439 = vmatpush1.msra.mxu0 0.0
        %440 = vmatprep.subr.mxu0 0.0
        %441 = vmatpush1.msra.mxu0 0.0
        %442 = vmatprep.subr.mxu0 0.0
        %443 = vmatpush1.msra.mxu0 0.0
        %444 = vmatprep.subr.mxu0 0.0
        %445 = vmatpush1.msra.mxu0 0.0
        %446 = vmatprep.subr.mxu0 0.0
        %447 = vmatpush1.msra.mxu0 0.0
        %448 = vmatprep.subr.mxu0 0.0
        %449 = vmatpush1.msra.mxu0 0.0
        %450 = vmatprep.subr.mxu0 0.0
        %451 = vmatpush1.msra.mxu0 0.0
        %452 = vmatprep.subr.mxu0 0.0
        %453 = vmatpush1.msra.mxu0 0.0
        %454 = vmatprep.subr.mxu0 0.0
        %455 = vmatpush1.msra.mxu0 0.0
        %456 = vmatprep.subr.mxu0 0.0
        %457 = vmatpush1.msra.mxu0 0.0
        %458 = vmatprep.subr.mxu0 0.0
        %459 = vmatpush1.msra.mxu0 0.0
        %460 = vmatprep.subr.mxu0 0.0
        %461 = vmatpush1.msra.mxu0 0.0
        %462 = vmatprep.mubr.f32.mxu0 0.0
        %463 = vmatmul.mubr.f32.gmra.mrb[0].mxu0 %v389
        %v464 = vpop.f32.mrb[0].mxu0
        %v465 = vadd.f32 %v385, %v464
        %v466 = vpop.f32.mrb[0].mxu0
        %v467 = vadd.f32 %v385, %v466
        %468 = vdwg.mxu0
        %469 = vst [vmem:[%s226] sm:$0xff] %v465
        %470 = vst [vmem:[%s226 + $0x8] sm:$0xff] %v467
        %s471 = sand.u32 %s120, 1
        %s472 = scalar_lea.sflag [#allocation5], %s471
        %s473 = sand.u32 %s120, 1
        %s474 = smul.addr %s473, 16
        %s475 = scalar_lea.vmem [#allocation6], %s474
        // Predicated region
        $region41: #{tpu_custom_call.1} parent=31 // pred_check
          %p476 = pneg %p130
        $region42: #{tpu_custom_call.1} parent=31 // pred_check_branch
          %478 = sbr.rel (%p476) target = $region44
        $region43: #{tpu_custom_call.1} parent=31 // pred_region
          %s480 = ssub.s32 256, 256
          %481 = vsyncadd %s472, %s480
          %s482 = smul.addr %s25, 2
          %s483 = smul.addr %s24, 2
          %s484 = sadd.s32 %s482, %s483
          %s485 = smul.addr %s484, 128
          %s486 = scalar_lea.hbm %s3, %s485
          %s488 = sshll.u32 %s475, 4
          %s489 = int_to_ptr.vmem [resolvable:$true] %s488
          %491 = dma.vmem_to_hbm [thread:$0]  %s489, 256, %s486, %s472
        $region44: #{tpu_custom_call.1} parent=31 // pred_fallthru
          _
      $region32: #{tpu_custom_call.1} parent=5 // pred_fallthru
        _
      %p492 = scmp.le.s32.totalorder 2, %s15
      // Predicated region
      $region45: #{tpu_custom_call.1} parent=5 // pred_check
        %p493 = pneg %p492
      $region46: #{tpu_custom_call.1} parent=5 // pred_check_branch
        %495 = sbr.rel (%p493) target = $region48
      $region47: #{tpu_custom_call.1} parent=5 // pred_region
        %s496 = ssub.s32 %s15, 2
        // Predicated region
        $region49: #{tpu_custom_call.1} parent=47 // pred_check
          %p497 = pneg %p136
        $region50: #{tpu_custom_call.1} parent=47 // pred_check_branch
          %499 = sbr.rel (%p497) target = $region52
        $region51: #{tpu_custom_call.1} parent=47 // pred_region
          %s500 = sand.u32 %s121, 1
          %s501 = scalar_lea.sflag [#allocation5], %s500
          %s502 = sand.u32 %s121, 1
          %s503 = smul.addr %s502, 16
          %s504 = scalar_lea.vmem [#allocation6], %s503
          %505 = dma.done %s501, 256
        $region52: #{tpu_custom_call.1} parent=47 // pred_fallthru
          _
      $region48: #{tpu_custom_call.1} parent=5 // pred_fallthru
        _
    $region6: #{tpu_custom_call.1} parent=1 // loop_footer
      %s19 = sadd.s32 1, %s15
    $region7: #{tpu_custom_call.1} parent=1 // loop_footer_branch
      %14 = sbr.rel target = $region3
    $region8: #{tpu_custom_call.1} parent=1 // loop_exit
      _
    %506 = vsyncpa [#allocation4], 1
    %s507 = scalar_lea.sflag [#allocation4], 1
    %508 = vsyncpa %s507, 1
    %509 = vsyncpa [#allocation5], 1
    %s510 = scalar_lea.sflag [#allocation5], 1
    %511 = vsyncpa %s510, 1

</llo_original>
